<compile_context>
chip_gen: v7x
topology: tpu7x:2x2x1
jax: 0.10.0
libtpu: 0.0.40
codegen_flags: <defaults>
</compile_context>

<pallas_src>
import functools

import jax
import jax.numpy as jnp
from jax import lax
from jax.experimental import pallas as pl
from jax.experimental.pallas import tpu as pltpu

_LANE = 128
_WIDE_COLS = 512            # lane-dense layout (4 * 128) for larger inputs
_TARGET_BLOCK_ROWS = 512    # ~1 MiB f32 per buffer at 512 cols
_TWO_PI = 6.283185307179586
_INV_2_24 = 1.0 / (1 << 24)


def _hash_u32(x):
    """lowbias32 finalizer: good avalanche, pure 32-bit VPU integer ops."""
    x = x ^ (x >> 16)
    x = x * jnp.uint32(0x7FEB352D)
    x = x ^ (x >> 15)
    x = x * jnp.uint32(0x846CA68B)
    x = x ^ (x >> 16)
    return x


def _gaussian_noise_kernel(seed_ref, x_ref, o_ref, *, scale):
    br, cols = x_ref.shape
    half = br // 2  # br is always a multiple of 8, hence even

    # ---- counter-based RNG: one counter per Box-Muller *pair* --------------
    pid = pl.program_id(0).astype(jnp.uint32)
    row = lax.broadcasted_iota(jnp.int32, (half, cols), 0).astype(jnp.uint32)
    col = lax.broadcasted_iota(jnp.int32, (half, cols), 1).astype(jnp.uint32)
    pair_idx = (pid * jnp.uint32(half) + row) * jnp.uint32(cols) + col

    seed = seed_ref[0].astype(jnp.uint32)
    salt = _hash_u32(seed * jnp.uint32(0x9E3779B1) + jnp.uint32(0x85EBCA6B))

    c_even = pair_idx * jnp.uint32(2)
    bits1 = _hash_u32(c_even ^ salt)
    bits2 = _hash_u32((c_even + jnp.uint32(1)) ^ salt)

    # Uniforms from the top 24 bits: u1 in (0, 1], u2 in [0, 1).
    u1 = ((bits1 >> 8).astype(jnp.float32) + 1.0) * _INV_2_24
    u2 = (bits2 >> 8).astype(jnp.float32) * _INV_2_24

    # ---- Box-Muller, both branches: one pair -> two standard normals -------
    r = jnp.sqrt(-2.0 * jnp.log(u1))
    theta = _TWO_PI * u2
    z1 = r * jnp.cos(theta)
    z2 = r * jnp.sin(theta)
    noise = jnp.concatenate([z1, z2], axis=0) * jnp.float32(scale)

    o_ref[...] = (x_ref[...].astype(jnp.float32) + noise).astype(o_ref.dtype)


def gaussian_noise(x, scale, seed=0):
    """Adds i.i.d. N(0, scale^2) noise to `x` via a Pallas TPU kernel."""
    orig_shape = x.shape
    orig_dtype = x.dtype
    n = x.size

    # Lane-dense layout: wide columns for large inputs, 128 for tiny ones.
    cols = _WIDE_COLS if n >= _WIDE_COLS * 8 else _LANE

    rows_needed = pl.cdiv(n, cols)
    rows_needed = pl.cdiv(rows_needed, 8) * 8  # sublane multiple

    if rows_needed <= _TARGET_BLOCK_ROWS:
        block_rows = rows_needed            # single block = whole slab
        rows = rows_needed
    else:
        block_rows = _TARGET_BLOCK_ROWS
        rows = pl.cdiv(rows_needed, block_rows) * block_rows

    n_pad = rows * cols
    xf = x.reshape(-1)
    if n_pad != n:
        xf = jnp.pad(xf, (0, n_pad - n))
    x2 = xf.reshape(rows, cols)
    grid = (rows // block_rows,)

    seed_arr = jnp.array([seed], dtype=jnp.int32)
    kernel = functools.partial(_gaussian_noise_kernel, scale=float(scale))

    out2 = pl.pallas_call(
        kernel,
        out_shape=jax.ShapeDtypeStruct((rows, cols), orig_dtype),
        grid_spec=pltpu.PrefetchScalarGridSpec(
            num_scalar_prefetch=1,
            grid=grid,
            in_specs=[pl.BlockSpec((block_rows, cols), lambda i, seed: (i, 0))],
            out_specs=pl.BlockSpec((block_rows, cols), lambda i, seed: (i, 0)),
        ),
        compiler_params=pltpu.CompilerParams(
            dimension_semantics=("parallel",),   # shards grid across TCs on v7x
            vmem_limit_bytes=64 * 1024 * 1024,
        ),
    )(seed_arr, x2)

    if n_pad != n:
        return out2.reshape(-1)[:n].reshape(orig_shape)
    return out2.reshape(orig_shape)


if __name__ == "__main__":
    key = jax.random.PRNGKey(0)
    # Small NCHW input consistent with a conv-style feature map.
    x = jax.random.normal(key, (2, 4, 16, 16), dtype=jnp.float32)
    scale = 0.3

    y = gaussian_noise(x, scale, seed=0)
    y = jax.block_until_ready(y)

    assert y.shape == x.shape and y.dtype == x.dtype

    # Sanity: noise statistics should roughly match N(0, scale^2).
    noise = y - x
    mean = float(jnp.mean(noise))
    std = float(jnp.std(noise))
    assert abs(mean) < 0.1, f"noise mean too large: {mean}"
    assert abs(std - scale) < 0.1, f"noise std off: {std} vs {scale}"

    print("KERNEL_OK")
</pallas_src>

<mosaic_0001>
module attributes {stable_mosaic.version = 11 : i64} {
  func.func @_gaussian_noise_kernel(%arg0: i32, %arg1: memref<1xi32, #tpu.memory_space<smem>>, %arg2: memref<16x128xf32, #tpu.memory_space<vmem>>, %arg3: memref<16x128xf32, #tpu.memory_space<vmem>>) attributes {dimension_semantics = [#tpu.dimension_semantics<parallel>], iteration_bounds = array<i64: 1>, scalar_prefetch = 1 : i64, scratch_operands = 0 : i64, tpu.core_type = #tpu.core_type<tc>, window_params = [{transform_indices = @transform_0, window_bounds = array<i64: 16, 128>}, {transform_indices = @transform_1, window_bounds = array<i64: 16, 128>}]} {
    %0 = tpu.iota {dimensions = array<i32: 0>} : vector<8x128xi32>
    %1 = tpu.iota {dimensions = array<i32: 1>} : vector<8x128xi32>
    %c8_i32 = arith.constant 8 : i32
    %2 = arith.muli %arg0, %c8_i32 : i32
    %3 = vector.broadcast %2 : i32 to vector<8x128xi32>
    %4 = arith.addi %3, %0 : vector<8x128xi32>
    %c128_i32 = arith.constant 128 : i32
    %5 = vector.broadcast %c128_i32 : i32 to vector<8x128xi32>
    %6 = arith.muli %4, %5 : vector<8x128xi32>
    %7 = arith.addi %6, %1 : vector<8x128xi32>
    %c0 = arith.constant 0 : index
    %8 = memref.load %arg1[%c0] : memref<1xi32, #tpu.memory_space<smem>>
    %c-1640531535_i32 = arith.constant -1640531535 : i32
    %9 = arith.muli %8, %c-1640531535_i32 : i32
    %c-2048144789_i32 = arith.constant -2048144789 : i32
    %10 = arith.addi %9, %c-2048144789_i32 : i32
    %c16_i32 = arith.constant 16 : i32
    %11 = arith.shrui %10, %c16_i32 : i32
    %12 = arith.xori %10, %11 : i32
    %c2146121005_i32 = arith.constant 2146121005 : i32
    %13 = arith.muli %12, %c2146121005_i32 : i32
    %c15_i32 = arith.constant 15 : i32
    %14 = arith.shrui %13, %c15_i32 : i32
    %15 = arith.xori %13, %14 : i32
    %c-2073254261_i32 = arith.constant -2073254261 : i32
    %16 = arith.muli %15, %c-2073254261_i32 : i32
    %c16_i32_0 = arith.constant 16 : i32
    %17 = arith.shrui %16, %c16_i32_0 : i32
    %18 = arith.xori %16, %17 : i32
    %c2_i32 = arith.constant 2 : i32
    %19 = vector.broadcast %c2_i32 : i32 to vector<8x128xi32>
    %20 = arith.muli %7, %19 : vector<8x128xi32>
    %21 = vector.broadcast %18 : i32 to vector<8x128xi32>
    %22 = arith.xori %20, %21 : vector<8x128xi32>
    %c16_i32_1 = arith.constant 16 : i32
    %23 = vector.broadcast %c16_i32_1 : i32 to vector<8x128xi32>
    %24 = arith.shrui %22, %23 : vector<8x128xi32>
    %25 = arith.xori %22, %24 : vector<8x128xi32>
    %c2146121005_i32_2 = arith.constant 2146121005 : i32
    %26 = vector.broadcast %c2146121005_i32_2 : i32 to vector<8x128xi32>
    %27 = arith.muli %25, %26 : vector<8x128xi32>
    %c15_i32_3 = arith.constant 15 : i32
    %28 = vector.broadcast %c15_i32_3 : i32 to vector<8x128xi32>
    %29 = arith.shrui %27, %28 : vector<8x128xi32>
    %30 = arith.xori %27, %29 : vector<8x128xi32>
    %c-2073254261_i32_4 = arith.constant -2073254261 : i32
    %31 = vector.broadcast %c-2073254261_i32_4 : i32 to vector<8x128xi32>
    %32 = arith.muli %30, %31 : vector<8x128xi32>
    %c16_i32_5 = arith.constant 16 : i32
    %33 = vector.broadcast %c16_i32_5 : i32 to vector<8x128xi32>
    %34 = arith.shrui %32, %33 : vector<8x128xi32>
    %35 = arith.xori %32, %34 : vector<8x128xi32>
    %c1_i32 = arith.constant 1 : i32
    %36 = vector.broadcast %c1_i32 : i32 to vector<8x128xi32>
    %37 = arith.addi %20, %36 : vector<8x128xi32>
    %38 = vector.broadcast %18 : i32 to vector<8x128xi32>
    %39 = arith.xori %37, %38 : vector<8x128xi32>
    %c16_i32_6 = arith.constant 16 : i32
    %40 = vector.broadcast %c16_i32_6 : i32 to vector<8x128xi32>
    %41 = arith.shrui %39, %40 : vector<8x128xi32>
    %42 = arith.xori %39, %41 : vector<8x128xi32>
    %c2146121005_i32_7 = arith.constant 2146121005 : i32
    %43 = vector.broadcast %c2146121005_i32_7 : i32 to vector<8x128xi32>
    %44 = arith.muli %42, %43 : vector<8x128xi32>
    %c15_i32_8 = arith.constant 15 : i32
    %45 = vector.broadcast %c15_i32_8 : i32 to vector<8x128xi32>
    %46 = arith.shrui %44, %45 : vector<8x128xi32>
    %47 = arith.xori %44, %46 : vector<8x128xi32>
    %c-2073254261_i32_9 = arith.constant -2073254261 : i32
    %48 = vector.broadcast %c-2073254261_i32_9 : i32 to vector<8x128xi32>
    %49 = arith.muli %47, %48 : vector<8x128xi32>
    %c16_i32_10 = arith.constant 16 : i32
    %50 = vector.broadcast %c16_i32_10 : i32 to vector<8x128xi32>
    %51 = arith.shrui %49, %50 : vector<8x128xi32>
    %52 = arith.xori %49, %51 : vector<8x128xi32>
    %c8_i32_11 = arith.constant 8 : i32
    %53 = vector.broadcast %c8_i32_11 : i32 to vector<8x128xi32>
    %54 = arith.shrui %35, %53 : vector<8x128xi32>
    %55 = arith.uitofp %54 : vector<8x128xi32> to vector<8x128xf32>
    %cst = arith.constant 1.000000e+00 : f32
    %56 = vector.broadcast %cst : f32 to vector<8x128xf32>
    %57 = arith.addf %55, %56 : vector<8x128xf32>
    %cst_12 = arith.constant 5.96046448E-8 : f32
    %58 = vector.broadcast %cst_12 : f32 to vector<8x128xf32>
    %59 = arith.mulf %57, %58 : vector<8x128xf32>
    %c8_i32_13 = arith.constant 8 : i32
    %60 = vector.broadcast %c8_i32_13 : i32 to vector<8x128xi32>
    %61 = arith.shrui %52, %60 : vector<8x128xi32>
    %62 = arith.uitofp %61 : vector<8x128xi32> to vector<8x128xf32>
    %cst_14 = arith.constant 5.96046448E-8 : f32
    %63 = vector.broadcast %cst_14 : f32 to vector<8x128xf32>
    %64 = arith.mulf %62, %63 : vector<8x128xf32>
    %65 = math.log %59 : vector<8x128xf32>
    %cst_15 = arith.constant -2.000000e+00 : f32
    %66 = vector.broadcast %cst_15 : f32 to vector<8x128xf32>
    %67 = arith.mulf %66, %65 : vector<8x128xf32>
    %68 = math.sqrt %67 : vector<8x128xf32>
    %cst_16 = arith.constant 6.28318548 : f32
    %69 = vector.broadcast %cst_16 : f32 to vector<8x128xf32>
    %70 = arith.mulf %69, %64 : vector<8x128xf32>
    %71 = math.cos %70 : vector<8x128xf32>
    %72 = arith.mulf %68, %71 : vector<8x128xf32>
    %73 = math.sin %70 : vector<8x128xf32>
    %74 = arith.mulf %68, %73 : vector<8x128xf32>
    %75 = tpu.concatenate %72, %74 in 0 : vector<8x128xf32>, vector<8x128xf32> -> vector<16x128xf32>
    %cst_17 = arith.constant 3.000000e-01 : f32
    %76 = vector.broadcast %cst_17 : f32 to vector<16x128xf32>
    %77 = arith.mulf %75, %76 : vector<16x128xf32>
    %c0_18 = arith.constant 0 : index
    %c0_19 = arith.constant 0 : index
    %78 = vector.load %arg2[%c0_18, %c0_19] : memref<16x128xf32, #tpu.memory_space<vmem>>, vector<16x128xf32>
    %79 = arith.addf %78, %77 : vector<16x128xf32>
    %c0_20 = arith.constant 0 : index
    %c0_21 = arith.constant 0 : index
    %80 = vector.load %arg3[%c0_20, %c0_21] : memref<16x128xf32, #tpu.memory_space<vmem>>, vector<16x128xf32>
    tpu.vector_store %arg3[%c0_20, %c0_21], %79 {strides = array<i32>} : memref<16x128xf32, #tpu.memory_space<vmem>>, vector<16x128xf32>,
    return
  }
  func.func @transform_0(%arg0: i32, %arg1: memref<1xi32, #tpu.memory_space<smem>>) -> (i32, i32) {
    %c0_i32 = arith.constant 0 : i32
    %c0_i32_0 = arith.constant 0 : i32
    return %arg0, %c0_i32 : i32, i32
  }
  func.func @transform_1(%arg0: i32, %arg1: memref<1xi32, #tpu.memory_space<smem>>) -> (i32, i32) {
    %c0_i32 = arith.constant 0 : i32
    %c0_i32_0 = arith.constant 0 : i32
    return %arg0, %c0_i32 : i32, i32
  }
}

</mosaic_0001>

<llo_original>
// kernel: tpu_custom_call.1
$region0: #{tpu_custom_call.1}
  #allocation0 [shape = 'u32[]', space=smem, size = 0x4, offset = 0x4, fixed_abs, tag = 'smem constant byte address 0x4 - core index']
  #allocation1 [shape = 'u32[144,128]{1,0:T(1,128)}', space=vmem, size = 0x12000, scoped, tag = 'internal scratch']
  #allocation2 [shape = 's32[1]{0}', space=sflag, size = 0x4, scoped, tag = 'scoped memory for tpu_custom_call.1']
  #allocation3 [shape = 's32[1]{0:T(128)S(6)}', space=smem, size = 0x200, scoped, tag = 'prefetched SMEM operand 0']
  %s0 = inlined_call_operand.<no memory space> [shape: s32[1], index: 0, kind: input, shape index: {}]
  %s1 = inlined_call_operand.hbm [shape: f32[16,128], index: 1, kind: input, shape index: {}]
  %s2 = inlined_call_operand.hbm [shape: f32[16,128], index: 2, kind: output, shape index: {}]
  %s3 = sld [smem:[#allocation0]]
  $region18: #{tpu_custom_call.1} parent=0
    _
  %s5 = ssub.s32 1, %s3
  %s6 = scalar_select 0, %s5, %s3
  %7 = sst [smem:[#allocation3]] %s0
  $region1: #{tpu_custom_call.1} parent=0
    #allocation4 [shape = 'u8[8192]{0}', space=vmem, size = 0x2000, scoped, tag = 'input window, operand 1, single buffered']
    #allocation5 [shape = 's32[1]{0}', space=sflag, size = 0x4, scoped, tag = 'scoped memory for tpu_custom_call.1']
    #allocation6 [shape = 's32[1]{0}', space=sflag, size = 0x4, scoped, tag = 'scoped memory for tpu_custom_call.1']
    #allocation7 [shape = 'u8[8192]{0}', space=vmem, size = 0x2000, scoped, tag = 'output window, operand 0, single buffered']
    %8 = vsyncpa [#allocation5], 0
    %9 = vsyncpa [#allocation6], 0
    // Predicated region
    $region2: #{tpu_custom_call.1} parent=1 // pred_check
      _
    $region3: #{tpu_custom_call.1} parent=1 // pred_check_branch
      %11 = sbr.rel (0) target = $region5
    $region4: #{tpu_custom_call.1} parent=1 // pred_region
      %s13 = ssub.s32 256, 256
      %14 = vsyncadd [#allocation5], %s13
      %s15 = sshll.u32 [#allocation4], 4
      %s16 = int_to_ptr.vmem [resolvable:$true] %s15
      %21 = dma.hbm_to_vmem [thread:$0]  %s1, 256, %s16, [#allocation5], 128, 128, 8
    $region5: #{tpu_custom_call.1} parent=1 // pred_fallthru
      _
    // Predicated region
    $region6: #{tpu_custom_call.1} parent=1 // pred_check
      _
    $region7: #{tpu_custom_call.1} parent=1 // pred_check_branch
      %23 = sbr.rel (0) target = $region9
    $region8: #{tpu_custom_call.1} parent=1 // pred_region
      %24 = dma.done [#allocation5], 256
    $region9: #{tpu_custom_call.1} parent=1 // pred_fallthru
      _
    %v25 = vlaneseq
    %v26 = vshrl.u32 %v25, 7
    %v27 = vlaneseq
    %v28 = vand.u32 %v27, 127
    %s29 = smul.u32 0, 8
    %v30 = vstv %s29
    %v31 = vadd.s32 %v30, %v26
    %v32 = vmul.u32 %v31, 128
    %v33 = vadd.s32 %v32, %v28
    %s34 = sld [smem:[#allocation3]]
    %s35 = smul.u32 %s34, 2654435761
    %s36 = sadd.s32 %s35, 2246822507
    %s37 = sshrl.u32 %s36, 16
    %s38 = sxor.u32 %s36, %s37
    %s39 = smul.u32 %s38, 2146121005
    %s40 = sshrl.u32 %s39, 15
    %s41 = sxor.u32 %s39, %s40
    %s42 = smul.u32 %s41, 2221713035
    %s43 = sshrl.u32 %s42, 16
    %s44 = sxor.u32 %s42, %s43
    %v45 = vmul.u32 %v33, 2
    %v46 = vstv %s44
    %v47 = vxor.u32 %v45, %v46
    %v48 = vshrl.u32 %v47, 16
    %v49 = vxor.u32 %v47, %v48
    %v50 = vmul.u32 %v49, 2146121005
    %v51 = vshrl.u32 %v50, 15
    %v52 = vxor.u32 %v50, %v51
    %v53 = vmul.u32 %v52, 2221713035
    %v54 = vshrl.u32 %v53, 16
    %v55 = vxor.u32 %v53, %v54
    %v56 = vadd.s32 %v45, 1
    %v57 = vxor.u32 %v56, %v46
    %v58 = vshrl.u32 %v57, 16
    %v59 = vxor.u32 %v57, %v58
    %v60 = vmul.u32 %v59, 2146121005
    %v61 = vshrl.u32 %v60, 15
    %v62 = vxor.u32 %v60, %v61
    %v63 = vmul.u32 %v62, 2221713035
    %v64 = vshrl.u32 %v63, 16
    %v65 = vxor.u32 %v63, %v64
    %v66 = vshrl.u32 %v55, 8
    %v67 = vshrl.u32 %v66, 16
    %v68 = vand.u32 %v66, 65535
    %v69 = vcvt.s32.f32 %v67
    %v70 = vmul.f32 %v69, 65536.0
    %v71 = vcvt.s32.f32 %v68
    %v72 = vadd.f32 %v70, %v71
    %v73 = vadd.f32 %v72, 1.0
    %v74 = vmul.f32 %v73, 5.9604645e-08
    %v75 = vshrl.u32 %v65, 8
    %v76 = vshrl.u32 %v75, 16
    %v77 = vand.u32 %v75, 65535
    %v78 = vcvt.s32.f32 %v76
    %v79 = vmul.f32 %v78, 65536.0
    %v80 = vcvt.s32.f32 %v77
    %v81 = vadd.f32 %v79, %v80
    %v82 = vmul.f32 %v81, 5.9604645e-08
    %v83 = vlog2.pop %v74
    %v84 = vmul.f32 %v83, 0.6931472
    %v85 = vmul.f32 %v84, -2.0
    %v86 = vrsqrt.pop %v85
    %v87 = vmul.f32 %v85, %v86
    %vm88 = vcmp.eq.f32.partialorder %v85, inf
    %v89 = vsel %vm88, %v85, %v87
    %vm90 = vcmp.eq.f32.partialorder %v85, 0.0
    %v91 = vand.u32 %v85, 2147483648
    %v92 = vsel %vm90, %v91, %v89
    %v93 = vmul.f32 %v82, 6.2831855
    %v94 = vand.u32 2147483647, %v93
    %vm95 = vcmp.le.f32.partialorder %v94, 0.7853982
    %vm96 = vcmp.lt.s32.totalorder %v93, 0
    %v97 = vand.u32 %v93, 2139095040
    %v98 = vshrl.u32 %v97, 23
    %v99 = vsub.s32 %v98, 127
    %v100 = vand.u32 2147483647, %v93
    %v101 = vand.u32 %v100, 8388607
    %v102 = vor.u32 %v101, 8388608
    %v103 = vsub.s32 0, %v102
    %v104 = vadd.s32 %v99, 1
    %vm105 = vcmp.gt.s32.totalorder %v104, 0
    %v106 = vsel %vm105, %v104, 0
    %v107 = vshrl.u32 %v106, 5
    %v108 = vand.u32 %v106, 31
    %v109 = vsub.s32 32, %v108
    %v110 = vshrl.u32 683565275, %v109
    %v111 = vshll.u32 683565275, %v108
    %v112 = vshrl.u32 2475754826, %v109
    %v113 = vor.u32 %v111, %v112
    %v114 = vshll.u32 2475754826, %v108
    %v115 = vshrl.u32 2131351028, %v109
    %v116 = vor.u32 %v114, %v115
    %v117 = vshll.u32 2131351028, %v108
    %v118 = vshrl.u32 2102212464, %v109
    %v119 = vor.u32 %v117, %v118
    %v120 = vshll.u32 2102212464, %v108
    %v121 = vshrl.u32 920167782, %v109
    %v122 = vor.u32 %v120, %v121
    %v123 = vshll.u32 920167782, %v108
    %v124 = vshrl.u32 1326507024, %v109
    %v125 = vor.u32 %v123, %v124
    %vm126 = vcmp.lt.s32.totalorder %v107, 1
    %vm127 = vcmp.lt.s32.totalorder %v107, 2
    %vm128 = vcmp.lt.s32.totalorder %v107, 3
    %vm129 = vcmp.lt.s32.totalorder %v107, 4
    %v130 = vsel %vm126, %v110, %v113
    %v131 = vsel %vm129, %v119, 2102212464
    %v132 = vsel %vm128, %v116, %v131
    %v133 = vsel %vm127, %v130, %v132
    %v134 = vsel %vm126, %v113, %v116
    %v135 = vsel %vm129, %v122, 920167782
    %v136 = vsel %vm128, %v119, %v135
    %v137 = vsel %vm127, %v134, %v136
    %v138 = vsel %vm126, %v116, %v119
    %v139 = vsel %vm129, %v125, 1326507024
    %v140 = vsel %vm128, %v122, %v139
    %v141 = vsel %vm127, %v138, %v140
    %v142 = vshll.u32 %v102, 8
    %v143 = vmul.u32.u64.compose %v142, %v141
    %v144 = vextract.low.u32 %v143
    %v145 = vextract.high.u32 %v143
    %v146 = vmul.u32.u64.compose %v142, %v137
    %v147 = vextract.low.u32 %v146
    %v148 = vextract.high.u32 %v146
    %v149 = vmul.u32 %v142, %v133
    %v150 = vadd.s32 %v145, %v147
    %vm151 = vc.u32 %v145, %v147
    %v152 = vadd.s32 %v148, 1
    %v153 = vsel %vm151, %v152, %v148
    %v154 = vadd.s32 %v149, %v153
    %v155 = vadd.s32 %v154, 536870912
    %v156 = vshrl.u32 %v155, 30
    %v157 = vshll.u32 %v156, 30
    %v158 = vsub.s32 %v154, %v157
    %vm159 = vcmp.lt.s32.totalorder %v158, 0
    %v160 = vsub.s32 0, %v158
    %v161 = vsel %vm159, %v160, %v158
    %v162 = vclz %v161
    %v163 = vsub.s32 %v162, 2
    %vm164 = vcmp.gt.s32.totalorder 0, %v163
    %v165 = vsel %vm164, 0, %v163
    %v166 = vsub.s32 32, %v165
    %v167 = vshll.u32 %v158, %v165
    %v168 = vshrl.u32 %v150, %v166
    %v169 = vor.u32 %v167, %v168
    %v170 = vsub.s32 4294967266, %v165
    %v171 = vadd.s32 %v170, 127
    %v172 = vshll.u32 %v171, 23
    %v173 = vor.u32 4788187, %v172
    %v174 = vand.u32 2147483647, %v173
    %v176 = vcvt.s32.f32 %v169
    %v177 = vmul.f32 %v176, %v174
    %v178 = vxor.u32 %v177, 2147483648
    %v179 = vsel %vm96, %v178, %v177
    %v180 = vsub.s32 4, %v156
    %v181 = vsel %vm96, %v180, %v156
    %v182 = vsel %vm95, %v93, %v179
    %v183 = vsel %vm95, 0, %v181
    %v184 = vcosq.f32.pop %v182
    %v185 = vsinq.f32.pop %v182
    %vm186 = vweird.f32 %v93
    %v187 = vand.u32 %v183, 3
    %vm188 = vcmp.lt.s32.totalorder %v187, 2
    %vm189 = vcmp.eq.s32.totalorder %v187, 0
    %v190 = vxor.u32 %v185, 2147483648
    %v191 = vsel %vm189, %v184, %v190
    %vm192 = vcmp.eq.s32.totalorder %v187, 2
    %v193 = vxor.u32 %v184, 2147483648
    %v194 = vsel %vm192, %v193, %v185
    %v195 = vsel %vm188, %v191, %v194
    %v196 = vsel %vm186, nan, %v195
    %v197 = vmul.f32 %v92, %v196
    %v198 = vand.u32 2147483647, %v93
    %vm199 = vcmp.le.f32.partialorder %v198, 0.7853982
    %vm200 = vcmp.lt.s32.totalorder %v93, 0
    %v201 = vand.u32 %v93, 2139095040
    %v202 = vshrl.u32 %v201, 23
    %v203 = vsub.s32 %v202, 127
    %v204 = vand.u32 2147483647, %v93
    %v205 = vand.u32 %v204, 8388607
    %v206 = vor.u32 %v205, 8388608
    %v207 = vsub.s32 0, %v206
    %v208 = vadd.s32 %v203, 1
    %vm209 = vcmp.gt.s32.totalorder %v208, 0
    %v210 = vsel %vm209, %v208, 0
    %v211 = vshrl.u32 %v210, 5
    %v212 = vand.u32 %v210, 31
    %v213 = vsub.s32 32, %v212
    %v214 = vshrl.u32 683565275, %v213
    %v215 = vshll.u32 683565275, %v212
    %v216 = vshrl.u32 2475754826, %v213
    %v217 = vor.u32 %v215, %v216
    %v218 = vshll.u32 2475754826, %v212
    %v219 = vshrl.u32 2131351028, %v213
    %v220 = vor.u32 %v218, %v219
    %v221 = vshll.u32 2131351028, %v212
    %v222 = vshrl.u32 2102212464, %v213
    %v223 = vor.u32 %v221, %v222
    %v224 = vshll.u32 2102212464, %v212
    %v225 = vshrl.u32 920167782, %v213
    %v226 = vor.u32 %v224, %v225
    %v227 = vshll.u32 920167782, %v212
    %v228 = vshrl.u32 1326507024, %v213
    %v229 = vor.u32 %v227, %v228
    %vm230 = vcmp.lt.s32.totalorder %v211, 1
    %vm231 = vcmp.lt.s32.totalorder %v211, 2
    %vm232 = vcmp.lt.s32.totalorder %v211, 3
    %vm233 = vcmp.lt.s32.totalorder %v211, 4
    %v234 = vsel %vm230, %v214, %v217
    %v235 = vsel %vm233, %v223, 2102212464
    %v236 = vsel %vm232, %v220, %v235
    %v237 = vsel %vm231, %v234, %v236
    %v238 = vsel %vm230, %v217, %v220
    %v239 = vsel %vm233, %v226, 920167782
    %v240 = vsel %vm232, %v223, %v239
    %v241 = vsel %vm231, %v238, %v240
    %v242 = vsel %vm230, %v220, %v223
    %v243 = vsel %vm233, %v229, 1326507024
    %v244 = vsel %vm232, %v226, %v243
    %v245 = vsel %vm231, %v242, %v244
    %v246 = vshll.u32 %v206, 8
    %v247 = vmul.u32.u64.compose %v246, %v245
    %v248 = vextract.low.u32 %v247
    %v249 = vextract.high.u32 %v247
    %v250 = vmul.u32.u64.compose %v246, %v241
    %v251 = vextract.low.u32 %v250
    %v252 = vextract.high.u32 %v250
    %v253 = vmul.u32 %v246, %v237
    %v254 = vadd.s32 %v249, %v251
    %vm255 = vc.u32 %v249, %v251
    %v256 = vadd.s32 %v252, 1
    %v257 = vsel %vm255, %v256, %v252
    %v258 = vadd.s32 %v253, %v257
    %v259 = vadd.s32 %v258, 536870912
    %v260 = vshrl.u32 %v259, 30
    %v261 = vshll.u32 %v260, 30
    %v262 = vsub.s32 %v258, %v261
    %vm263 = vcmp.lt.s32.totalorder %v262, 0
    %v264 = vsub.s32 0, %v262
    %v265 = vsel %vm263, %v264, %v262
    %v266 = vclz %v265
    %v267 = vsub.s32 %v266, 2
    %vm268 = vcmp.gt.s32.totalorder 0, %v267
    %v269 = vsel %vm268, 0, %v267
    %v270 = vsub.s32 32, %v269
    %v271 = vshll.u32 %v262, %v269
    %v272 = vshrl.u32 %v254, %v270
    %v273 = vor.u32 %v271, %v272
    %v274 = vsub.s32 4294967266, %v269
    %v275 = vadd.s32 %v274, 127
    %v276 = vshll.u32 %v275, 23
    %v277 = vor.u32 4788187, %v276
    %v278 = vand.u32 2147483647, %v277
    %v280 = vcvt.s32.f32 %v273
    %v281 = vmul.f32 %v280, %v278
    %v282 = vxor.u32 %v281, 2147483648
    %v283 = vsel %vm200, %v282, %v281
    %v284 = vsub.s32 4, %v260
    %v285 = vsel %vm200, %v284, %v260
    %v286 = vsel %vm199, %v93, %v283
    %v287 = vsel %vm199, 0, %v285
    %v288 = vcosq.f32.pop %v286
    %v289 = vsinq.f32.pop %v286
    %vm290 = vweird.f32 %v93
    %v291 = vadd.s32 %v287, 3
    %v292 = vand.u32 %v291, 3
    %vm293 = vcmp.lt.s32.totalorder %v292, 2
    %vm294 = vcmp.eq.s32.totalorder %v292, 0
    %v295 = vxor.u32 %v289, 2147483648
    %v296 = vsel %vm294, %v288, %v295
    %vm297 = vcmp.eq.s32.totalorder %v292, 2
    %v298 = vxor.u32 %v288, 2147483648
    %v299 = vsel %vm297, %v298, %v289
    %v300 = vsel %vm293, %v296, %v299
    %v301 = vsel %vm290, nan, %v300
    %v302 = vmul.f32 %v92, %v301
    %v303 = vmul.f32 %v197, 0.3
    %v304 = vmul.f32 %v302, 0.3
    %v305 = vld [vmem:[#allocation4] sm:$0xff]
    %v306 = vld [vmem:[#allocation4 + $0x8] sm:$0xff]
    %v307 = vadd.f32 %v305, %v303
    %v308 = vadd.f32 %v306, %v304
    %309 = vst [vmem:[#allocation7] sm:$0xff] %v307
    %310 = vst [vmem:[#allocation7 + $0x8] sm:$0xff] %v308
    // Predicated region
    $region10: #{tpu_custom_call.1} parent=1 // pred_check
      _
    $region11: #{tpu_custom_call.1} parent=1 // pred_check_branch
      %312 = sbr.rel (0) target = $region13
    $region12: #{tpu_custom_call.1} parent=1 // pred_region
      %s314 = ssub.s32 256, 256
      %315 = vsyncadd [#allocation6], %s314
      %s316 = sshll.u32 [#allocation7], 4
      %s317 = int_to_ptr.vmem [resolvable:$true] %s316
      %322 = dma.vmem_to_hbm [thread:$0]  %s317, 256, %s2, [#allocation6], 128, 128, 8
    $region13: #{tpu_custom_call.1} parent=1 // pred_fallthru
      _
    // Predicated region
    $region14: #{tpu_custom_call.1} parent=1 // pred_check
      _
    $region15: #{tpu_custom_call.1} parent=1 // pred_check_branch
      %324 = sbr.rel (0) target = $region17
    $region16: #{tpu_custom_call.1} parent=1 // pred_region
      %325 = dma.done [#allocation6], 256
    $region17: #{tpu_custom_call.1} parent=1 // pred_fallthru
      _
    %326 = vsyncpa [#allocation5], 1
    %327 = vsyncpa [#allocation6], 1

</llo_original>
